<compile_context>
chip_gen: v6e
topology: v6e:2x2x1
jax: 0.10.0
libtpu: 0.0.40
codegen_flags: <defaults>
</compile_context>

<pallas_src>
import math

import numpy as np

import jax
import jax.numpy as jnp
from jax.experimental import pallas as pl
from jax.experimental.pallas import tpu as pltpu


def _vmem_limit_bytes():
    """Per-generation VMEM limit with headroom (v7x 64 MiB, v5e/v6e 128 MiB)."""
    cap = 64 * 1024 * 1024
    try:
        cap = int(pltpu.get_tpu_info().vmem_capacity_bytes)
    except Exception:
        pass
    return max(32 * 1024 * 1024, min(cap * 3 // 4, 112 * 1024 * 1024))


def _pick_l_tile(lp, c_in, c_out, in_isz, budget_bytes):
    """Largest 128-multiple divisor of lp whose double-buffered blocks fit budget."""
    best = 128
    t = 128
    cap = min(lp, 8192)
    while t <= cap:
        if lp % t == 0:
            foot = 2 * (c_in * t * in_isz + 2 * c_out * t * 2) + 4 * c_out * c_in * 2
            if foot <= budget_bytes:
                best = t
        t += 128
    return best


def _upsample_kernel(x_ref, halo_ref, w_ref, shift_ref, even_ref, odd_ref):
    """Fused ConvTranspose1d(k=4,s=2,p=3) + BN(inference) + GELU for one L tile.

    x_ref     : [1, C_in, TL]      input block; column j = x_ext[t*TL + j + 1]
    halo_ref  : [1, 1, C_in, 2]    (left, right) halo columns = x_ext[t*TL], x_ext[t*TL+TL+1]
    w_ref     : [4, C_out, C_in]   bf16 transposed taps with BN scale folded in
    shift_ref : [C_out, 1]         f32: (conv_bias - bn_mean)*scale + beta
    even_ref  : [1, C_out, TL]     bf16 even phase (y[2m] = w3.x_ext[m] + w1.x_ext[m+1])
    odd_ref   : [1, C_out, TL]     bf16 odd  phase (y[2m+1] = w2.x_ext[m+1] + w0.x_ext[m+2])
    """
    tl = x_ref.shape[2]
    xb = x_ref[0]                         # [C_in, TL]  = x_ext[m+1] operand
    halo = halo_ref[0, 0]                 # [C_in, 2]
    hl = halo[:, 0:1]                     # [C_in, 1]  x_ext[t*TL]
    hr = halo[:, 1:2]                     # [C_in, 1]  x_ext[t*TL + TL + 1]

    lane = jax.lax.broadcasted_iota(jnp.int32, xb.shape, 1)
    # pltpu.roll follows jnp.roll semantics: result[:, i] = x[:, (i - shift) % TL].
    xm = jnp.where(lane == 0, hl, pltpu.roll(xb, shift=1, axis=1))            # x_ext[m]
    xm2 = jnp.where(lane == tl - 1, hr, pltpu.roll(xb, shift=tl - 1, axis=1))  # x_ext[m+2]

    bf = jnp.bfloat16
    w0, w1, w2, w3 = w_ref[0], w_ref[1], w_ref[2], w_ref[3]   # [C_out, C_in] bf16
    even = (jnp.dot(w3, xm.astype(bf), preferred_element_type=jnp.float32)
            + jnp.dot(w1, xb.astype(bf), preferred_element_type=jnp.float32))
    odd = (jnp.dot(w2, xb.astype(bf), preferred_element_type=jnp.float32)
           + jnp.dot(w0, xm2.astype(bf), preferred_element_type=jnp.float32))

    shift = shift_ref[...]                # [C_out, 1] f32, broadcasts over lanes
    c = math.sqrt(2.0 / math.pi)

    def _bn_act(y):                       # BN shift + tanh-GELU, f32 (v5e-safe)
        y = y + shift
        return 0.5 * y * (1.0 + jnp.tanh(c * (y + 0.044715 * y * y * y)))

    even_ref[0] = _bn_act(even).astype(even_ref.dtype)
    odd_ref[0] = _bn_act(odd).astype(odd_ref.dtype)


def upsample_forward(dense_fea, params):
    """dense_fea: [bs, C_in, n_stk, n_stk_pnt] -> [bs, C_out, n_stk, 2*n_stk_pnt] (bf16)."""
    w = params["conv_w"]          # [C_in, C_out, 4]  (ConvTranspose1d layout)
    b = params["conv_b"]          # [C_out]
    gamma = params["bn_gamma"]    # [C_out]
    beta = params["bn_beta"]      # [C_out]
    mean = params["bn_mean"]      # [C_out]
    var = params["bn_var"]        # [C_out]
    eps = params["bn_eps"]

    bs, c_in, n_stk, n_stk_pnt = dense_fea.shape
    c_out = w.shape[1]
    L = n_stk * n_stk_pnt
    in_isz = np.dtype(dense_fea.dtype).itemsize

    # Metadata-only flatten of the stroke axes; pad L to a 128 multiple so all
    # stores are lane-dense (edge mode keeps boundary outputs exact, padded
    # columns are cropped after the kernel).
    x = dense_fea.reshape(bs, c_in, L)
    Lp = max(128, ((L + 127) // 128) * 128)
    if Lp != L:
        x = jnp.pad(x, ((0, 0), (0, 0), (0, Lp - L)), mode="edge")

    vmem_limit = _vmem_limit_bytes()
    tl = _pick_l_tile(Lp, c_in, c_out, in_isz, vmem_limit // 2)
    n_t = Lp // tl

    # Tiny per-tile halo columns (left = x_ext[t*tl], right = x_ext[t*tl+tl+1]).
    starts = np.arange(n_t, dtype=np.int64) * tl
    halo_idx = np.stack([np.maximum(starts - 1, 0),
                         np.minimum(starts + tl, Lp - 1)], axis=1).reshape(-1)
    halos = jnp.take(x, jnp.asarray(halo_idx, dtype=jnp.int32), axis=2)   # [bs,C_in,2*n_t]
    halos = jnp.transpose(halos.reshape(bs, c_in, n_t, 2), (0, 2, 1, 3))  # [bs,n_t,C_in,2]

    # Fold BN scale into the conv weights; keep the per-channel shift separate.
    scale = gamma / jnp.sqrt(var + eps)                         # [C_out]
    w_s = w.astype(jnp.float32) * scale[None, :, None]          # [C_in, C_out, 4]
    wt = jnp.transpose(w_s, (2, 1, 0)).astype(jnp.bfloat16)     # [4, C_out, C_in]
    shift = ((b - mean) * scale + beta).astype(jnp.float32)[:, None]   # [C_out, 1]

    flops = int(8 * bs * c_in * c_out * Lp)
    bytes_accessed = int(bs * c_in * Lp * in_isz + bs * n_t * c_in * 2 * in_isz
                         + 4 * c_out * c_in * 2 + c_out * 4
                         + 2 * bs * c_out * Lp * 2)

    even, odd = pl.pallas_call(
        _upsample_kernel,
        out_shape=(
            jax.ShapeDtypeStruct((bs, c_out, Lp), jnp.bfloat16),
            jax.ShapeDtypeStruct((bs, c_out, Lp), jnp.bfloat16),
        ),
        grid=(bs, n_t),
        in_specs=[
            pl.BlockSpec((1, c_in, tl), lambda bi, ti: (bi, 0, ti)),
            pl.BlockSpec((1, 1, c_in, 2), lambda bi, ti: (bi, ti, 0, 0)),
            pl.BlockSpec((4, c_out, c_in), lambda bi, ti: (0, 0, 0)),
            pl.BlockSpec((c_out, 1), lambda bi, ti: (0, 0)),
        ],
        out_specs=(
            pl.BlockSpec((1, c_out, tl), lambda bi, ti: (bi, 0, ti)),
            pl.BlockSpec((1, c_out, tl), lambda bi, ti: (bi, 0, ti)),
        ),
        compiler_params=pltpu.CompilerParams(
            dimension_semantics=("parallel", "parallel"),
            vmem_limit_bytes=int(vmem_limit),
        ),
        cost_estimate=pl.CostEstimate(
            flops=flops,
            transcendentals=int(2 * bs * c_out * Lp),
            bytes_accessed=bytes_accessed,
        ),
    )(x, halos, wt, shift)

    # Single fused interleave (y[2m]=even[m], y[2m+1]=odd[m]) + final reshape.
    even = even[:, :, :L]
    odd = odd[:, :, :L]
    out = jnp.stack([even, odd], axis=-1)          # [bs, C_out, L, 2] contiguous
    return out.reshape(bs, c_out, n_stk, 2 * n_stk_pnt)


def upsample_reference(dense_fea, params):
    """Independent f32 reference: naive ConvTranspose1d scatter-add + BN + GELU."""
    w = params["conv_w"].astype(jnp.float32)
    b, gamma, beta = params["conv_b"], params["bn_gamma"], params["bn_beta"]
    mean, var, eps = params["bn_mean"], params["bn_var"], params["bn_eps"]

    bs, c_in, n_stk, n_stk_pnt = dense_fea.shape
    c_out = w.shape[1]
    L = n_stk * n_stk_pnt
    x = dense_fea.reshape(bs, c_in, L).astype(jnp.float32)
    x_ext = jnp.concatenate([x[:, :, :1], x, x[:, :, -1:]], axis=2)  # [bs,C_in,L+2]
    n_in = L + 2

    contrib = jnp.einsum("bci,cok->boki", x_ext, w)  # [bs, C_out, 4, n_in]
    y_full = jnp.zeros((bs, c_out, 2 * (n_in - 1) + 4), jnp.float32)
    for k in range(4):  # output position = 2*i - padding + k (before cropping)
        y_full = y_full.at[:, :, k : k + 2 * n_in - 1 : 2].add(contrib[:, :, k, :])
    y = y_full[:, :, 3 : 3 + 2 * L] + b[None, :, None]

    y = (y - mean[None, :, None]) / jnp.sqrt(var + eps)[None, :, None]
    y = y * gamma[None, :, None] + beta[None, :, None]
    c = math.sqrt(2.0 / math.pi)
    y = 0.5 * y * (1.0 + jnp.tanh(c * (y + 0.044715 * y ** 3)))
    return y.reshape(bs, c_out, n_stk, 2 * n_stk_pnt)


def init_params(key, dim_in, dim_out):
    """Deterministic synthetic parameters (ConvTranspose1d/BatchNorm1d shapes)."""
    k1, k2, k3, k4, k5, k6 = jax.random.split(key, 6)
    bound = 1.0 / math.sqrt(dim_in * 4)
    return {
        "conv_w": jax.random.uniform(k1, (dim_in, dim_out, 4), jnp.float32, -bound, bound),
        "conv_b": jax.random.uniform(k2, (dim_out,), jnp.float32, -bound, bound),
        "bn_gamma": 1.0 + 0.1 * jax.random.normal(k3, (dim_out,), jnp.float32),
        "bn_beta": 0.1 * jax.random.normal(k4, (dim_out,), jnp.float32),
        "bn_mean": 0.05 * jax.random.normal(k5, (dim_out,), jnp.float32),
        "bn_var": jax.random.uniform(k6, (dim_out,), jnp.float32, 0.5, 1.5),
        "bn_eps": 1e-5,
    }


if __name__ == "__main__":
    key = jax.random.PRNGKey(0)
    k_x, k_p = jax.random.split(key)

    bs, dim_in, dim_out = 2, 8, 16
    n_stk, n_stk_pnt = 4, 32  # L = 128 -> one lane-dense 128-wide tile, grid (2, 1)

    dense_fea = jax.random.normal(k_x, (bs, dim_in, n_stk, n_stk_pnt), jnp.float32)
    params = init_params(k_p, dim_in, dim_out)

    fwd = jax.jit(upsample_forward)
    out = jax.block_until_ready(fwd(dense_fea, params))

    assert out.shape == (bs, dim_out, n_stk, 2 * n_stk_pnt), out.shape
    out_f32 = out.astype(jnp.float32)
    assert bool(jnp.all(jnp.isfinite(out_f32)))

    ref = upsample_reference(dense_fea, params)
    err = float(jnp.max(jnp.abs(out_f32 - ref)))
    assert err < 0.1, f"max abs error vs reference too large: {err}"  # bf16 tolerance

    print("KERNEL_OK")
</pallas_src>

<mosaic_0001>
module attributes {stable_mosaic.version = 11 : i64} {
  func.func @_upsample_kernel(%arg0: i32, %arg1: i32, %arg2: memref<1x8x128xf32, #tpu.memory_space<vmem>>, %arg3: memref<1x1x8x2xf32, #tpu.memory_space<vmem>>, %arg4: memref<4x16x8xbf16, #tpu.memory_space<vmem>>, %arg5: memref<16x1xf32, #tpu.memory_space<vmem>>, %arg6: memref<1x16x128xbf16, #tpu.memory_space<vmem>>, %arg7: memref<1x16x128xbf16, #tpu.memory_space<vmem>>) attributes {dimension_semantics = [#tpu.dimension_semantics<parallel>, #tpu.dimension_semantics<parallel>], iteration_bounds = array<i64: 2, 1>, scalar_prefetch = 0 : i64, scratch_operands = 0 : i64, tpu.core_type = #tpu.core_type<tc>, window_params = [{transform_indices = @transform_0, window_bounds = array<i64: 1, 8, 128>}, {transform_indices = @transform_1, window_bounds = array<i64: 1, 1, 8, 2>}, {pipeline_mode = #tpu.pipeline_mode<synchronous>, transform_indices = @transform_2, window_bounds = array<i64: 4, 16, 8>}, {pipeline_mode = #tpu.pipeline_mode<synchronous>, transform_indices = @transform_3, window_bounds = array<i64: 16, 1>}, {transform_indices = @transform_4, window_bounds = array<i64: 1, 16, 128>}, {transform_indices = @transform_5, window_bounds = array<i64: 1, 16, 128>}]} {
    %c0 = arith.constant 0 : index
    %c0_0 = arith.constant 0 : index
    %c0_1 = arith.constant 0 : index
    %0 = vector.load %arg2[%c0, %c0_0, %c0_1] : memref<1x8x128xf32, #tpu.memory_space<vmem>>, vector<1x8x128xf32>
    %1 = vector.shape_cast %0 : vector<1x8x128xf32> to vector<8x128xf32>
    %c0_2 = arith.constant 0 : index
    %c0_3 = arith.constant 0 : index
    %c0_4 = arith.constant 0 : index
    %c0_5 = arith.constant 0 : index
    %2 = vector.load %arg3[%c0_2, %c0_3, %c0_4, %c0_5] : memref<1x1x8x2xf32, #tpu.memory_space<vmem>>, vector<1x1x8x2xf32>
    %3 = vector.shape_cast %2 : vector<1x1x8x2xf32> to vector<8x2xf32>
    %4 = vector.extract_strided_slice %3 {offsets = [0, 0], sizes = [8, 1], strides = [1, 1]} : vector<8x2xf32> to vector<8x1xf32>
    %5 = vector.extract_strided_slice %3 {offsets = [0, 1], sizes = [8, 1], strides = [1, 1]} : vector<8x2xf32> to vector<8x1xf32>
    %6 = tpu.iota {dimensions = array<i32: 1>} : vector<8x128xi32>
    %c0_i32 = arith.constant 0 : i32
    %7 = vector.broadcast %c0_i32 : i32 to vector<8x128xi32>
    %8 = arith.cmpi eq, %6, %7 : vector<8x128xi32>
    %c1_i32 = arith.constant 1 : i32
    %9 = tpu.dynamic_rotate %1 by %c1_i32 dim 1 : vector<8x128xf32>, i32 -> vector<8x128xf32>
    %10 = vector.shape_cast %4 : vector<8x1xf32> to vector<8x1xf32>
    %11 = vector.broadcast %10 : vector<8x1xf32> to vector<8x128xf32>
    %12 = arith.select %8, %11, %9 : vector<8x128xi1>, vector<8x128xf32>
    %c127_i32 = arith.constant 127 : i32
    %13 = vector.broadcast %c127_i32 : i32 to vector<8x128xi32>
    %14 = arith.cmpi eq, %6, %13 : vector<8x128xi32>
    %c127_i32_6 = arith.constant 127 : i32
    %15 = tpu.dynamic_rotate %1 by %c127_i32_6 dim 1 : vector<8x128xf32>, i32 -> vector<8x128xf32>
    %16 = vector.shape_cast %5 : vector<8x1xf32> to vector<8x1xf32>
    %17 = vector.broadcast %16 : vector<8x1xf32> to vector<8x128xf32>
    %18 = arith.select %14, %17, %15 : vector<8x128xi1>, vector<8x128xf32>
    %c0_7 = arith.constant 0 : index
    %c0_8 = arith.constant 0 : index
    %c0_9 = arith.constant 0 : index
    %19 = vector.load %arg4[%c0_7, %c0_8, %c0_9] : memref<4x16x8xbf16, #tpu.memory_space<vmem>>, vector<1x16x8xbf16>
    %20 = vector.shape_cast %19 : vector<1x16x8xbf16> to vector<16x8xbf16>
    %c1 = arith.constant 1 : index
    %c0_10 = arith.constant 0 : index
    %c0_11 = arith.constant 0 : index
    %21 = vector.load %arg4[%c1, %c0_10, %c0_11] : memref<4x16x8xbf16, #tpu.memory_space<vmem>>, vector<1x16x8xbf16>
    %22 = vector.shape_cast %21 : vector<1x16x8xbf16> to vector<16x8xbf16>
    %c2 = arith.constant 2 : index
    %c0_12 = arith.constant 0 : index
    %c0_13 = arith.constant 0 : index
    %23 = vector.load %arg4[%c2, %c0_12, %c0_13] : memref<4x16x8xbf16, #tpu.memory_space<vmem>>, vector<1x16x8xbf16>
    %24 = vector.shape_cast %23 : vector<1x16x8xbf16> to vector<16x8xbf16>
    %c3 = arith.constant 3 : index
    %c0_14 = arith.constant 0 : index
    %c0_15 = arith.constant 0 : index
    %25 = vector.load %arg4[%c3, %c0_14, %c0_15] : memref<4x16x8xbf16, #tpu.memory_space<vmem>>, vector<1x16x8xbf16>
    %26 = vector.shape_cast %25 : vector<1x16x8xbf16> to vector<16x8xbf16>
    %27 = arith.truncf %12 : vector<8x128xf32> to vector<8x128xbf16>
    %cst = arith.constant dense<0.000000e+00> : vector<16x128xf32>
    %28 = tpu.matmul %26, %27, %cst {dimension_numbers = #tpu.dot_dimension_numbers<[1], [0], [0], [1], [0, 0, 1, 1], [], []>} : vector<16x8xbf16>, vector<8x128xbf16>, vector<16x128xf32> -> vector<16x128xf32>
    %29 = arith.truncf %1 : vector<8x128xf32> to vector<8x128xbf16>
    %cst_16 = arith.constant dense<0.000000e+00> : vector<16x128xf32>
    %30 = tpu.matmul %22, %29, %cst_16 {dimension_numbers = #tpu.dot_dimension_numbers<[1], [0], [0], [1], [0, 0, 1, 1], [], []>} : vector<16x8xbf16>, vector<8x128xbf16>, vector<16x128xf32> -> vector<16x128xf32>
    %31 = arith.addf %28, %30 : vector<16x128xf32>
    %32 = arith.truncf %1 : vector<8x128xf32> to vector<8x128xbf16>
    %cst_17 = arith.constant dense<0.000000e+00> : vector<16x128xf32>
    %33 = tpu.matmul %24, %32, %cst_17 {dimension_numbers = #tpu.dot_dimension_numbers<[1], [0], [0], [1], [0, 0, 1, 1], [], []>} : vector<16x8xbf16>, vector<8x128xbf16>, vector<16x128xf32> -> vector<16x128xf32>
    %34 = arith.truncf %18 : vector<8x128xf32> to vector<8x128xbf16>
    %cst_18 = arith.constant dense<0.000000e+00> : vector<16x128xf32>
    %35 = tpu.matmul %20, %34, %cst_18 {dimension_numbers = #tpu.dot_dimension_numbers<[1], [0], [0], [1], [0, 0, 1, 1], [], []>} : vector<16x8xbf16>, vector<8x128xbf16>, vector<16x128xf32> -> vector<16x128xf32>
    %36 = arith.addf %33, %35 : vector<16x128xf32>
    %c0_19 = arith.constant 0 : index
    %c0_20 = arith.constant 0 : index
    %37 = vector.load %arg5[%c0_19, %c0_20] : memref<16x1xf32, #tpu.memory_space<vmem>>, vector<16x1xf32>
    %38 = vector.broadcast %37 : vector<16x1xf32> to vector<16x128xf32>
    %39 = arith.addf %31, %38 : vector<16x128xf32>
    %cst_21 = arith.constant 5.000000e-01 : f32
    %40 = vector.broadcast %cst_21 : f32 to vector<16x128xf32>
    %41 = arith.mulf %40, %39 : vector<16x128xf32>
    %cst_22 = arith.constant 4.471500e-02 : f32
    %42 = vector.broadcast %cst_22 : f32 to vector<16x128xf32>
    %43 = arith.mulf %42, %39 : vector<16x128xf32>
    %44 = arith.mulf %43, %39 : vector<16x128xf32>
    %45 = arith.mulf %44, %39 : vector<16x128xf32>
    %46 = arith.addf %39, %45 : vector<16x128xf32>
    %cst_23 = arith.constant 0.797884583 : f32
    %47 = vector.broadcast %cst_23 : f32 to vector<16x128xf32>
    %48 = arith.mulf %47, %46 : vector<16x128xf32>
    %49 = math.tanh %48 : vector<16x128xf32>
    %cst_24 = arith.constant 1.000000e+00 : f32
    %50 = vector.broadcast %cst_24 : f32 to vector<16x128xf32>
    %51 = arith.addf %50, %49 : vector<16x128xf32>
    %52 = arith.mulf %41, %51 : vector<16x128xf32>
    %53 = arith.truncf %52 : vector<16x128xf32> to vector<16x128xbf16>
    %c0_25 = arith.constant 0 : index
    %c0_26 = arith.constant 0 : index
    %c0_27 = arith.constant 0 : index
    %54 = vector.load %arg6[%c0_25, %c0_26, %c0_27] : memref<1x16x128xbf16, #tpu.memory_space<vmem>>, vector<1x16x128xbf16>
    %55 = vector.shape_cast %54 : vector<1x16x128xbf16> to vector<16x128xbf16>
    %56 = vector.shape_cast %53 : vector<16x128xbf16> to vector<1x16x128xbf16>
    tpu.vector_store %arg6[%c0_25, %c0_26, %c0_27], %56 {strides = array<i32>} : memref<1x16x128xbf16, #tpu.memory_space<vmem>>, vector<1x16x128xbf16>,
    %57 = vector.broadcast %37 : vector<16x1xf32> to vector<16x128xf32>
    %58 = arith.addf %36, %57 : vector<16x128xf32>
    %cst_28 = arith.constant 5.000000e-01 : f32
    %59 = vector.broadcast %cst_28 : f32 to vector<16x128xf32>
    %60 = arith.mulf %59, %58 : vector<16x128xf32>
    %cst_29 = arith.constant 4.471500e-02 : f32
    %61 = vector.broadcast %cst_29 : f32 to vector<16x128xf32>
    %62 = arith.mulf %61, %58 : vector<16x128xf32>
    %63 = arith.mulf %62, %58 : vector<16x128xf32>
    %64 = arith.mulf %63, %58 : vector<16x128xf32>
    %65 = arith.addf %58, %64 : vector<16x128xf32>
    %cst_30 = arith.constant 0.797884583 : f32
    %66 = vector.broadcast %cst_30 : f32 to vector<16x128xf32>
    %67 = arith.mulf %66, %65 : vector<16x128xf32>
    %68 = math.tanh %67 : vector<16x128xf32>
    %cst_31 = arith.constant 1.000000e+00 : f32
    %69 = vector.broadcast %cst_31 : f32 to vector<16x128xf32>
    %70 = arith.addf %69, %68 : vector<16x128xf32>
    %71 = arith.mulf %60, %70 : vector<16x128xf32>
    %72 = arith.truncf %71 : vector<16x128xf32> to vector<16x128xbf16>
    %c0_32 = arith.constant 0 : index
    %c0_33 = arith.constant 0 : index
    %c0_34 = arith.constant 0 : index
    %73 = vector.load %arg7[%c0_32, %c0_33, %c0_34] : memref<1x16x128xbf16, #tpu.memory_space<vmem>>, vector<1x16x128xbf16>
    %74 = vector.shape_cast %73 : vector<1x16x128xbf16> to vector<16x128xbf16>
    %75 = vector.shape_cast %72 : vector<16x128xbf16> to vector<1x16x128xbf16>
    tpu.vector_store %arg7[%c0_32, %c0_33, %c0_34], %75 {strides = array<i32>} : memref<1x16x128xbf16, #tpu.memory_space<vmem>>, vector<1x16x128xbf16>,
    return
  }
  func.func @transform_0(%arg0: i32, %arg1: i32) -> (i32, i32, i32) {
    %c0_i32 = arith.constant 0 : i32
    %c0_i32_0 = arith.constant 0 : i32
    return %arg0, %c0_i32, %arg1 : i32, i32, i32
  }
  func.func @transform_1(%arg0: i32, %arg1: i32) -> (i32, i32, i32, i32) {
    %c0_i32 = arith.constant 0 : i32
    %c0_i32_0 = arith.constant 0 : i32
    %c0_i32_1 = arith.constant 0 : i32
    return %arg0, %arg1, %c0_i32, %c0_i32_0 : i32, i32, i32, i32
  }
  func.func @transform_2(%arg0: i32, %arg1: i32) -> (i32, i32, i32) {
    %c0_i32 = arith.constant 0 : i32
    %c0_i32_0 = arith.constant 0 : i32
    %c0_i32_1 = arith.constant 0 : i32
    %c0_i32_2 = arith.constant 0 : i32
    return %c0_i32, %c0_i32_0, %c0_i32_1 : i32, i32, i32
  }
  func.func @transform_3(%arg0: i32, %arg1: i32) -> (i32, i32) {
    %c0_i32 = arith.constant 0 : i32
    %c0_i32_0 = arith.constant 0 : i32
    %c0_i32_1 = arith.constant 0 : i32
    return %c0_i32, %c0_i32_0 : i32, i32
  }
  func.func @transform_4(%arg0: i32, %arg1: i32) -> (i32, i32, i32) {
    %c0_i32 = arith.constant 0 : i32
    %c0_i32_0 = arith.constant 0 : i32
    return %arg0, %c0_i32, %arg1 : i32, i32, i32
  }
  func.func @transform_5(%arg0: i32, %arg1: i32) -> (i32, i32, i32) {
    %c0_i32 = arith.constant 0 : i32
    %c0_i32_0 = arith.constant 0 : i32
    return %arg0, %c0_i32, %arg1 : i32, i32, i32
  }
}

</mosaic_0001>

<llo_original>
// kernel: upsample_forward.1
$region0: #{upsample_forward.1}
  #allocation0 [shape = 'u32[]', space=smem, size = 0x4, offset = 0x4, fixed_abs, tag = 'smem constant byte address 0x4 - core index']
  #allocation1 [shape = 'u32[144,128]{1,0:T(1,128)}', space=vmem, size = 0x12000, scoped, tag = 'internal scratch']
  %s0 = inlined_call_operand.vmem [shape: f32[2,8,128], index: 0, kind: input, shape index: {}]
  %s1 = inlined_call_operand.vmem [shape: f32[2,1,8,2], index: 1, kind: input, shape index: {}]
  %s2 = inlined_call_operand.vmem [shape: bf16[4,16,8], index: 2, kind: input, shape index: {}]
  %s3 = inlined_call_operand.vmem [shape: f32[16,1], index: 3, kind: input, shape index: {}]
  %s4 = inlined_call_operand.vmem [shape: bf16[2,16,128], index: 4, kind: output, shape index: {0}]
  %s5 = inlined_call_operand.vmem [shape: bf16[2,16,128], index: 5, kind: output, shape index: {1}]
  %6 = xla_tuple %s4, %s5
  %s7 = sld [smem:[#allocation0]]
  $region57: #{upsample_forward.1} parent=0
    _
  %s9 = ssub.s32 1, %s7
  %s10 = scalar_select 0, %s9, %s7
  loop: start=0, step=1, limit=4
  $region2: #{upsample_forward.1} parent=0 // loop_pre_header
    _
  $region3: #{upsample_forward.1} parent=0 // loop_header
    %s12 = sphi 0, %s16
    %p13 = scmp.ge.s32.totalorder %s12, 4
    %s19 = sphi 0, %s31
    %s20 = sphi 0, %s27
    %s21 = sphi 0, %s19
    %s22 = sphi 0, %s20
    %s23 = sphi 0, %s21
    %s24 = sphi 0, %s22
    %s36 = sphi 0, %s38
    %s39 = sphi 0, %s36
    %s40 = sphi 0, %s39
    %s56 = sphi 0, %s40
    %s64 = sphi 0, %s66
    %s67 = sphi 0, %s64
    %s68 = sphi 0, %s67
    %s84 = sphi 0, %s68
    %s88 = sphi 0, %s88
    %s90 = sphi 0, %s88
    %s91 = sphi 0, %s90
    %s105 = sphi 0, %s91
    %s109 = sphi 0, %s109
    %s111 = sphi 0, %s109
    %s112 = sphi 0, %s111
    %s126 = sphi 0, %s112
    %s134 = sphi 0, %s136
    %s137 = sphi 0, %s134
    %s138 = sphi 0, %s137
    %s154 = sphi 0, %s138
    %s162 = sphi 0, %s164
    %s165 = sphi 0, %s162
    %s166 = sphi 0, %s165
    %s182 = sphi 0, %s166
  $region4: #{upsample_forward.1} parent=0 // loop_header_branch
    %15 = sbr.rel (%p13) target = $region8
  $region5: #{upsample_forward.1} parent=0 // loop_body
    %s17 = ssub.s32 %s12, 1
    %s18 = ssub.s32 %s12, 2
    %s25 = sadd.s32 1, %s20
    %p26 = scmp.ge.s32.totalorder %s25, 1
    %s27 = scalar_select %p26, 0, %s25
    %s28 = sadd.s32 1, %s19
    %s29 = scalar_select %p26, %s28, %s19
    %p30 = scmp.ge.s32.totalorder %s29, 2
    %s31 = scalar_select %p30, 0, %s29
    %s32 = ssub.s32 %s19, %s31
    %s33 = ssub.s32 %s20, %s27
    %s34 = sor.u32 %s32, %s33
    %p35 = scmp.eq.s32.totalorder %s34, 0
    %s37 = sadd.s32 %s36, 1
    %s38 = scalar_select %p35, %s36, %s37
    %p41 = pneg %p35
    %p42 = scmp.eq.s32.totalorder %s12, 1
    %p43 = por %p41, %p42
    %p44 = scmp.ne.s32.totalorder %s36, %s39
    %p45 = scmp.eq.s32.totalorder %s12, 0
    %p46 = por %p44, %p45
    %p47 = scmp.ne.s32.totalorder %s36, %s39
    %p48 = scmp.eq.s32.totalorder %s17, 1
    %p49 = por %p47, %p48
    %p50 = scmp.ne.s32.totalorder %s39, %s40
    %p51 = scmp.eq.s32.totalorder %s17, 0
    %p52 = por %p50, %p51
    %p53 = scmp.ne.s32.totalorder %s39, %s40
    %p54 = scmp.eq.s32.totalorder %s18, 1
    %p55 = por %p53, %p54
    %p57 = scmp.ne.s32.totalorder %s40, %s56
    %p58 = scmp.eq.s32.totalorder %s18, 0
    %p59 = por %p57, %p58
    %s60 = ssub.s32 %s19, %s31
    %s61 = ssub.s32 %s20, %s27
    %s62 = sor.u32 %s60, %s61
    %p63 = scmp.eq.s32.totalorder %s62, 0
    %s65 = sadd.s32 %s64, 1
    %s66 = scalar_select %p63, %s64, %s65
    %p69 = pneg %p63
    %p70 = scmp.eq.s32.totalorder %s12, 1
    %p71 = por %p69, %p70
    %p72 = scmp.ne.s32.totalorder %s64, %s67
    %p73 = scmp.eq.s32.totalorder %s12, 0
    %p74 = por %p72, %p73
    %p75 = scmp.ne.s32.totalorder %s64, %s67
    %p76 = scmp.eq.s32.totalorder %s17, 1
    %p77 = por %p75, %p76
    %p78 = scmp.ne.s32.totalorder %s67, %s68
    %p79 = scmp.eq.s32.totalorder %s17, 0
    %p80 = por %p78, %p79
    %p81 = scmp.ne.s32.totalorder %s67, %s68
    %p82 = scmp.eq.s32.totalorder %s18, 1
    %p83 = por %p81, %p82
    %p85 = scmp.ne.s32.totalorder %s68, %s84
    %p86 = scmp.eq.s32.totalorder %s18, 0
    %p87 = por %p85, %p86
    %s89 = sadd.s32 %s88, 1
    %p92 = scmp.eq.s32.totalorder %s12, 1
    %p93 = scmp.ne.s32.totalorder %s88, %s90
    %p94 = scmp.eq.s32.totalorder %s12, 0
    %p95 = por %p93, %p94
    %p96 = scmp.ne.s32.totalorder %s88, %s90
    %p97 = scmp.eq.s32.totalorder %s17, 1
    %p98 = por %p96, %p97
    %p99 = scmp.ne.s32.totalorder %s90, %s91
    %p100 = scmp.eq.s32.totalorder %s17, 0
    %p101 = por %p99, %p100
    %p102 = scmp.ne.s32.totalorder %s90, %s91
    %p103 = scmp.eq.s32.totalorder %s18, 1
    %p104 = por %p102, %p103
    %p106 = scmp.ne.s32.totalorder %s91, %s105
    %p107 = scmp.eq.s32.totalorder %s18, 0
    %p108 = por %p106, %p107
    %s110 = sadd.s32 %s109, 1
    %p113 = scmp.eq.s32.totalorder %s12, 1
    %p114 = scmp.ne.s32.totalorder %s109, %s111
    %p115 = scmp.eq.s32.totalorder %s12, 0
    %p116 = por %p114, %p115
    %p117 = scmp.ne.s32.totalorder %s109, %s111
    %p118 = scmp.eq.s32.totalorder %s17, 1
    %p119 = por %p117, %p118
    %p120 = scmp.ne.s32.totalorder %s111, %s112
    %p121 = scmp.eq.s32.totalorder %s17, 0
    %p122 = por %p120, %p121
    %p123 = scmp.ne.s32.totalorder %s111, %s112
    %p124 = scmp.eq.s32.totalorder %s18, 1
    %p125 = por %p123, %p124
    %p127 = scmp.ne.s32.totalorder %s112, %s126
    %p128 = scmp.eq.s32.totalorder %s18, 0
    %p129 = por %p127, %p128
    %s130 = ssub.s32 %s19, %s31
    %s131 = ssub.s32 %s20, %s27
    %s132 = sor.u32 %s130, %s131
    %p133 = scmp.eq.s32.totalorder %s132, 0
    %s135 = sadd.s32 %s134, 1
    %s136 = scalar_select %p133, %s134, %s135
    %p139 = pneg %p133
    %p140 = scmp.eq.s32.totalorder %s12, 1
    %p141 = por %p139, %p140
    %p142 = scmp.ne.s32.totalorder %s134, %s137
    %p143 = scmp.eq.s32.totalorder %s12, 0
    %p144 = por %p142, %p143
    %p145 = scmp.ne.s32.totalorder %s134, %s137
    %p146 = scmp.eq.s32.totalorder %s17, 1
    %p147 = por %p145, %p146
    %p148 = scmp.ne.s32.totalorder %s137, %s138
    %p149 = scmp.eq.s32.totalorder %s17, 0
    %p150 = por %p148, %p149
    %p151 = scmp.ne.s32.totalorder %s137, %s138
    %p152 = scmp.eq.s32.totalorder %s18, 1
    %p153 = por %p151, %p152
    %p155 = scmp.ne.s32.totalorder %s138, %s154
    %p156 = scmp.eq.s32.totalorder %s18, 0
    %p157 = por %p155, %p156
    %s158 = ssub.s32 %s19, %s31
    %s159 = ssub.s32 %s20, %s27
    %s160 = sor.u32 %s158, %s159
    %p161 = scmp.eq.s32.totalorder %s160, 0
    %s163 = sadd.s32 %s162, 1
    %s164 = scalar_select %p161, %s162, %s163
    %p167 = pneg %p161
    %p168 = scmp.eq.s32.totalorder %s12, 1
    %p169 = por %p167, %p168
    %p170 = scmp.ne.s32.totalorder %s162, %s165
    %p171 = scmp.eq.s32.totalorder %s12, 0
    %p172 = por %p170, %p171
    %p173 = scmp.ne.s32.totalorder %s162, %s165
    %p174 = scmp.eq.s32.totalorder %s17, 1
    %p175 = por %p173, %p174
    %p176 = scmp.ne.s32.totalorder %s165, %s166
    %p177 = scmp.eq.s32.totalorder %s17, 0
    %p178 = por %p176, %p177
    %p179 = scmp.ne.s32.totalorder %s165, %s166
    %p180 = scmp.eq.s32.totalorder %s18, 1
    %p181 = por %p179, %p180
    %p183 = scmp.ne.s32.totalorder %s166, %s182
    %p184 = scmp.eq.s32.totalorder %s18, 0
    %p185 = por %p183, %p184
    %p186 = scmp.le.s32.totalorder 1, %s12
    %p187 = scmp.lt.s32.totalorder %s12, 3
    %p188 = pnand %p186, %p187
    %p189 = pneg %p188
    // Predicated region
    $region9: #{upsample_forward.1} parent=5 // pred_check
      _
    $region10: #{upsample_forward.1} parent=5 // pred_check_branch
      %191 = sbr.rel (%p188) target = $region12
    $region11: #{upsample_forward.1} parent=5 // pred_region
      %s192 = ssub.s32 %s12, 1
      // Predicated region
      $region13: #{upsample_forward.1} parent=11 // pred_check
        %p193 = pneg %p101
      $region14: #{upsample_forward.1} parent=11 // pred_check_branch
        %195 = sbr.rel (%p193) target = $region16
      $region15: #{upsample_forward.1} parent=11 // pred_region
        _
      $region16: #{upsample_forward.1} parent=11 // pred_fallthru
        _
      // Predicated region
      $region17: #{upsample_forward.1} parent=11 // pred_check
        %p196 = pneg %p122
      $region18: #{upsample_forward.1} parent=11 // pred_check_branch
        %198 = sbr.rel (%p196) target = $region20
      $region19: #{upsample_forward.1} parent=11 // pred_region
        _
      $region20: #{upsample_forward.1} parent=11 // pred_fallthru
        _
    $region12: #{upsample_forward.1} parent=5 // pred_fallthru
      _
    %p199 = scmp.lt.s32.totalorder %s12, 2
    // Predicated region
    $region21: #{upsample_forward.1} parent=5 // pred_check
      %p200 = pneg %p199
    $region22: #{upsample_forward.1} parent=5 // pred_check_branch
      %202 = sbr.rel (%p200) target = $region24
    $region23: #{upsample_forward.1} parent=5 // pred_region
      // Predicated region
      $region25: #{upsample_forward.1} parent=23 // pred_check
        %p203 = pneg %p46
      $region26: #{upsample_forward.1} parent=23 // pred_check_branch
        %205 = sbr.rel (%p203) target = $region28
      $region27: #{upsample_forward.1} parent=23 // pred_region
        %p206 = scmp.lt.s32.totalorder %s19, 1
        %s207 = scalar_select %p206, %s19, 1
        %p208 = scmp.lt.s32.totalorder %s20, 0
        %s209 = scalar_select %p208, %s20, 0
        %s210 = sadd.s32 %s209, %s207
        %s211 = smul.addr %s210, 8
        %s212 = scalar_lea.vmem %s0, %s211
      $region28: #{upsample_forward.1} parent=23 // pred_fallthru
        _
      // Predicated region
      $region29: #{upsample_forward.1} parent=23 // pred_check
        %p213 = pneg %p74
      $region30: #{upsample_forward.1} parent=23 // pred_check_branch
        %215 = sbr.rel (%p213) target = $region32
      $region31: #{upsample_forward.1} parent=23 // pred_region
        %p216 = scmp.lt.s32.totalorder %s19, 1
        %s217 = scalar_select %p216, %s19, 1
        %p218 = scmp.lt.s32.totalorder %s20, 0
        %s219 = scalar_select %p218, %s20, 0
        %s220 = sadd.s32 %s219, %s217
        %s221 = smul.addr %s220, 8
        %s222 = scalar_lea.vmem %s1, %s221
      $region32: #{upsample_forward.1} parent=23 // pred_fallthru
        _
    $region24: #{upsample_forward.1} parent=5 // pred_fallthru
      _
    %p223 = scmp.le.s32.totalorder 1, %s12
    %p224 = scmp.lt.s32.totalorder %s12, 3
    %p225 = pnand %p223, %p224
    %p226 = pneg %p225
    // Predicated region
    $region33: #{upsample_forward.1} parent=5 // pred_check
      _
    $region34: #{upsample_forward.1} parent=5 // pred_check_branch
      %228 = sbr.rel (%p225) target = $region36
    $region35: #{upsample_forward.1} parent=5 // pred_region
      %s229 = ssub.s32 %s12, 1
      %p230 = scmp.lt.s32.totalorder %s21, 1
      %s231 = scalar_select %p230, %s21, 1
      %p232 = scmp.lt.s32.totalorder %s22, 0
      %s233 = scalar_select %p232, %s22, 0
      %s234 = sadd.s32 %s233, %s231
      %s235 = smul.addr %s234, 8
      %s236 = scalar_lea.vmem %s0, %s235
      %p237 = pneg %p52
      %p238 = pneg %p49
      %p239 = scmp.lt.s32.totalorder %s21, 1
      %s240 = scalar_select %p239, %s21, 1
      %p241 = scmp.lt.s32.totalorder %s22, 0
      %s242 = scalar_select %p241, %s22, 0
      %s243 = sadd.s32 %s242, %s240
      %s244 = smul.addr %s243, 8
      %s245 = scalar_lea.vmem %s1, %s244
      %p246 = pneg %p80
      %p247 = pneg %p77
      %p248 = pneg %p101
      %p249 = pneg %p98
      %p250 = pneg %p122
      %p251 = pneg %p119
      %p252 = pneg %p150
      %p253 = pneg %p147
      %p254 = scmp.lt.s32.totalorder %s21, 1
      %s255 = scalar_select %p254, %s21, 1
      %p256 = scmp.lt.s32.totalorder %s22, 0
      %s257 = scalar_select %p256, %s22, 0
      %s258 = smul.addr %s255, 2
      %s259 = sadd.s32 %s257, %s258
      %s260 = smul.addr %s259, 4
      %s261 = scalar_lea.vmem %s4, %s260
      %p262 = pneg %p178
      %p263 = pneg %p175
      %p264 = scmp.lt.s32.totalorder %s21, 1
      %s265 = scalar_select %p264, %s21, 1
      %p266 = scmp.lt.s32.totalorder %s22, 0
      %s267 = scalar_select %p266, %s22, 0
      %s268 = smul.addr %s265, 2
      %s269 = sadd.s32 %s267, %s268
      %s270 = smul.addr %s269, 4
      %s271 = scalar_lea.vmem %s5, %s270
      %p272 = scmp.lt.s32.totalorder %s21, 1
      %s273 = scalar_select %p272, %s21, 1
      %p274 = scmp.lt.s32.totalorder %s22, 0
      %s275 = scalar_select %p274, %s22, 0
      %s276 = sadd.s32 %s275, %s273
      %s277 = smul.addr %s276, 8
      %s278 = scalar_lea.vmem %s0, %s277
      %p279 = scmp.lt.s32.totalorder %s21, 1
      %s280 = scalar_select %p279, %s21, 1
      %p281 = scmp.lt.s32.totalorder %s22, 0
      %s282 = scalar_select %p281, %s22, 0
      %s283 = sadd.s32 %s282, %s280
      %s284 = smul.addr %s283, 8
      %s285 = scalar_lea.vmem %s1, %s284
      %p286 = scmp.lt.s32.totalorder %s21, 1
      %s287 = scalar_select %p286, %s21, 1
      %p288 = scmp.lt.s32.totalorder %s22, 0
      %s289 = scalar_select %p288, %s22, 0
      %s290 = smul.addr %s287, 2
      %s291 = sadd.s32 %s289, %s290
      %s292 = smul.addr %s291, 4
      %s293 = scalar_lea.vmem %s4, %s292
      %p294 = scmp.lt.s32.totalorder %s21, 1
      %s295 = scalar_select %p294, %s21, 1
      %p296 = scmp.lt.s32.totalorder %s22, 0
      %s297 = scalar_select %p296, %s22, 0
      %s298 = smul.addr %s295, 2
      %s299 = sadd.s32 %s297, %s298
      %s300 = smul.addr %s299, 4
      %s301 = scalar_lea.vmem %s5, %s300
      %v303 = vld [vmem:[%s278] sm:$0xff]
      %v304 = vld [vmem:[%s285] sm:$0xff]
      %v305 = vlaneseq
      %v306 = vand.u32 %v305, 127
      %vm307 = vcmp.eq.s32.totalorder %v306, 0
      %308 = vrot.lane.b32.xlu0 %v303, 1
      %v309 = vpop.permute.xlu0 %308
      %311 = vset.pattern.permute.xlu0 0
      %312 = vperm.xlu0 %311, %v304
      %v313 = vpop.permute.xlu0 %312
      %v315 = vsel %vm307, %v313, %v309
      %vm316 = vcmp.eq.s32.totalorder %v306, 127
      %317 = vrot.lane.b32.xlu0 %v303, 127
      %v318 = vpop.permute.xlu0 %317
      %319 = vset.pattern.permute.xlu0 1
      %320 = vperm.xlu0 %319, %v304
      %v321 = vpop.permute.xlu0 %320
      %v323 = vsel %vm316, %v321, %v318
      %v324 = vld [vmem:[%s2] sm:$0xf]
      %v325 = vld [vmem:[%s2 + $0x4] sm:$0xf]
      %s326 = scalar_lea.vmem %s2, 8
      %v327 = vld [vmem:[%s326] sm:$0xf]
      %v328 = vld [vmem:[%s326 + $0x4] sm:$0xf]
      %s329 = scalar_lea.vmem %s2, 16
      %v330 = vld [vmem:[%s329] sm:$0xf]
      %v331 = vld [vmem:[%s329 + $0x4] sm:$0xf]
      %s332 = scalar_lea.vmem %s2, 24
      %v333 = vld [vmem:[%s332] sm:$0xf]
      %v334 = vld [vmem:[%s332 + $0x4] sm:$0xf]
      %v335 = vpack.c.bf16 %v315, %v315
      %v336 = vpack.c.bf16 %v303, %v303
      %v339 = vunpack.c.l.b16 %v327
      %v340 = vunpack.c.l.b16 %v328
      %v341 = vpack.c.b16 %v340, %v339
      %vm342 = vcmask 64512
      %v344 = vsel %vm342, %v341, 0
      %vm346 = vcmask 1043456
      %v348 = vsel %vm346, %v336, 0
      %350 = vmatprep.subr.bf16.mxu0 0
      %351 = vmatpush1.bf16.msra.mxu0 0
      %352 = vmatprep.subr.bf16.mxu0 0
      %353 = vmatpush1.bf16.msra.mxu0 0
      %354 = vmatprep.subr.bf16.mxu0 0
      %355 = vmatpush1.bf16.msra.mxu0 0
      %356 = vmatprep.subr.bf16.mxu0 0
      %357 = vmatpush1.bf16.msra.mxu0 0
      %358 = vmatprep.subr.bf16.mxu0 0
      %359 = vmatpush1.bf16.msra.mxu0 0
      %360 = vmatprep.subr.bf16.mxu0 0
      %361 = vmatpush1.bf16.msra.mxu0 0
      %362 = vmatprep.subr.bf16.mxu0 0
      %363 = vmatpush1.bf16.msra.mxu0 0
      %364 = vmatprep.subr.bf16.mxu0 0
      %365 = vmatpush1.bf16.msra.mxu0 %v348
      %366 = vmatprep.subr.bf16.mxu0 0
      %367 = vmatpush2.bf16.msra.mxu0 0
      %368 = vmatprep.subr.bf16.mxu0 0
      %369 = vmatpush2.bf16.msra.mxu0 0
      %370 = vmatprep.subr.bf16.mxu0 0
      %371 = vmatpush2.bf16.msra.mxu0 0
      %372 = vmatprep.subr.bf16.mxu0 0
      %373 = vmatpush2.bf16.msra.mxu0 0
      %374 = vmatprep.subr.bf16.mxu0 0
      %375 = vmatpush2.bf16.msra.mxu0 0
      %376 = vmatprep.subr.bf16.mxu0 0
      %377 = vmatpush2.bf16.msra.mxu0 0
      %378 = vmatprep.subr.bf16.mxu0 0
      %379 = vmatpush2.bf16.msra.mxu0 0
      %380 = vmatprep.subr.bf16.mxu0 0
      %381 = vmatpush2.bf16.msra.mxu0 0
      %382 = vmatprep.mubr.bf16.mxu0 0
      %383 = vmatmul.mubr.bf16.gmra.mxu0 %v344
      %v384 = vpop.f32.mrf.mxu0
      %v385 = vadd.f32 0.0, %v384
      %v386 = vpop.f32.mrf.mxu0
      %v387 = vpop.f32.mrf.mxu0
      %v388 = vadd.f32 0.0, %v387
      %v389 = vpop.f32.mrf.mxu0
      %390 = vdwg.mxu0
      %v393 = vunpack.c.l.b16 %v333
      %v394 = vunpack.c.l.b16 %v334
      %v395 = vpack.c.b16 %v394, %v393
      %v397 = vsel %vm342, %v395, 0
      %v400 = vsel %vm346, %v335, 0
      %402 = vmatprep.subr.bf16.mxu0 0
      %403 = vmatpush1.bf16.msra.mxu0 0
      %404 = vmatprep.subr.bf16.mxu0 0
      %405 = vmatpush1.bf16.msra.mxu0 0
      %406 = vmatprep.subr.bf16.mxu0 0
      %407 = vmatpush1.bf16.msra.mxu0 0
      %408 = vmatprep.subr.bf16.mxu0 0
      %409 = vmatpush1.bf16.msra.mxu0 0
      %410 = vmatprep.subr.bf16.mxu0 0
      %411 = vmatpush1.bf16.msra.mxu0 0
      %412 = vmatprep.subr.bf16.mxu0 0
      %413 = vmatpush1.bf16.msra.mxu0 0
      %414 = vmatprep.subr.bf16.mxu0 0
      %415 = vmatpush1.bf16.msra.mxu0 0
      %416 = vmatprep.subr.bf16.mxu0 0
      %417 = vmatpush1.bf16.msra.mxu0 %v400
      %418 = vmatprep.subr.bf16.mxu0 0
      %419 = vmatpush2.bf16.msra.mxu0 0
      %420 = vmatprep.subr.bf16.mxu0 0
      %421 = vmatpush2.bf16.msra.mxu0 0
      %422 = vmatprep.subr.bf16.mxu0 0
      %423 = vmatpush2.bf16.msra.mxu0 0
      %424 = vmatprep.subr.bf16.mxu0 0
      %425 = vmatpush2.bf16.msra.mxu0 0
      %426 = vmatprep.subr.bf16.mxu0 0
      %427 = vmatpush2.bf16.msra.mxu0 0
      %428 = vmatprep.subr.bf16.mxu0 0
      %429 = vmatpush2.bf16.msra.mxu0 0
      %430 = vmatprep.subr.bf16.mxu0 0
      %431 = vmatpush2.bf16.msra.mxu0 0
      %432 = vmatprep.subr.bf16.mxu0 0
      %433 = vmatpush2.bf16.msra.mxu0 0
      %434 = vmatprep.mubr.bf16.mxu0 0
      %435 = vmatmul.mubr.bf16.gmra.mxu0 %v397
      %v436 = vpop.f32.mrf.mxu0
      %v437 = vadd.f32 %v385, %v436
      %v438 = vpop.f32.mrf.mxu0
      %v439 = vpop.f32.mrf.mxu0
      %v440 = vadd.f32 %v388, %v439
      %v441 = vpop.f32.mrf.mxu0
      %442 = vdwg.mxu0
      %v443 = vpack.c.bf16 %v323, %v323
      %v446 = vunpack.c.l.b16 %v324
      %v447 = vunpack.c.l.b16 %v325
      %v448 = vpack.c.b16 %v447, %v446
      %v450 = vsel %vm342, %v448, 0
      %v453 = vsel %vm346, %v443, 0
      %455 = vmatprep.subr.bf16.mxu0 0
      %456 = vmatpush1.bf16.msra.mxu0 0
      %457 = vmatprep.subr.bf16.mxu0 0
      %458 = vmatpush1.bf16.msra.mxu0 0
      %459 = vmatprep.subr.bf16.mxu0 0
      %460 = vmatpush1.bf16.msra.mxu0 0
      %461 = vmatprep.subr.bf16.mxu0 0
      %462 = vmatpush1.bf16.msra.mxu0 0
      %463 = vmatprep.subr.bf16.mxu0 0
      %464 = vmatpush1.bf16.msra.mxu0 0
      %465 = vmatprep.subr.bf16.mxu0 0
      %466 = vmatpush1.bf16.msra.mxu0 0
      %467 = vmatprep.subr.bf16.mxu0 0
      %468 = vmatpush1.bf16.msra.mxu0 0
      %469 = vmatprep.subr.bf16.mxu0 0
      %470 = vmatpush1.bf16.msra.mxu0 %v453
      %471 = vmatprep.subr.bf16.mxu0 0
      %472 = vmatpush2.bf16.msra.mxu0 0
      %473 = vmatprep.subr.bf16.mxu0 0
      %474 = vmatpush2.bf16.msra.mxu0 0
      %475 = vmatprep.subr.bf16.mxu0 0
      %476 = vmatpush2.bf16.msra.mxu0 0
      %477 = vmatprep.subr.bf16.mxu0 0
      %478 = vmatpush2.bf16.msra.mxu0 0
      %479 = vmatprep.subr.bf16.mxu0 0
      %480 = vmatpush2.bf16.msra.mxu0 0
      %481 = vmatprep.subr.bf16.mxu0 0
      %482 = vmatpush2.bf16.msra.mxu0 0
      %483 = vmatprep.subr.bf16.mxu0 0
      %484 = vmatpush2.bf16.msra.mxu0 0
      %485 = vmatprep.subr.bf16.mxu0 0
      %486 = vmatpush2.bf16.msra.mxu0 0
      %487 = vmatprep.mubr.bf16.mxu0 0
      %488 = vmatmul.mubr.bf16.gmra.mxu0 %v450
      %v489 = vpop.f32.mrf.mxu0
      %v490 = vadd.f32 0.0, %v489
      %v491 = vpop.f32.mrf.mxu0
      %v492 = vpop.f32.mrf.mxu0
      %v493 = vadd.f32 0.0, %v492
      %v494 = vpop.f32.mrf.mxu0
      %495 = vdwg.mxu0
      %v498 = vunpack.c.l.b16 %v330
      %v499 = vunpack.c.l.b16 %v331
      %v500 = vpack.c.b16 %v499, %v498
      %v502 = vsel %vm342, %v500, 0
      %504 = vmatprep.subr.bf16.mxu0 0
      %505 = vmatpush1.bf16.msra.mxu0 0
      %506 = vmatprep.subr.bf16.mxu0 0
      %507 = vmatpush1.bf16.msra.mxu0 0
      %508 = vmatprep.subr.bf16.mxu0 0
      %509 = vmatpush1.bf16.msra.mxu0 0
      %510 = vmatprep.subr.bf16.mxu0 0
      %511 = vmatpush1.bf16.msra.mxu0 0
      %512 = vmatprep.subr.bf16.mxu0 0
      %513 = vmatpush1.bf16.msra.mxu0 0
      %514 = vmatprep.subr.bf16.mxu0 0
      %515 = vmatpush1.bf16.msra.mxu0 0
      %516 = vmatprep.subr.bf16.mxu0 0
      %517 = vmatpush1.bf16.msra.mxu0 0
      %518 = vmatprep.subr.bf16.mxu0 0
      %519 = vmatpush1.bf16.msra.mxu0 %v348
      %520 = vmatprep.subr.bf16.mxu0 0
      %521 = vmatpush2.bf16.msra.mxu0 0
      %522 = vmatprep.subr.bf16.mxu0 0
      %523 = vmatpush2.bf16.msra.mxu0 0
      %524 = vmatprep.subr.bf16.mxu0 0
      %525 = vmatpush2.bf16.msra.mxu0 0
      %526 = vmatprep.subr.bf16.mxu0 0
      %527 = vmatpush2.bf16.msra.mxu0 0
      %528 = vmatprep.subr.bf16.mxu0 0
      %529 = vmatpush2.bf16.msra.mxu0 0
      %530 = vmatprep.subr.bf16.mxu0 0
      %531 = vmatpush2.bf16.msra.mxu0 0
      %532 = vmatprep.subr.bf16.mxu0 0
      %533 = vmatpush2.bf16.msra.mxu0 0
      %534 = vmatprep.subr.bf16.mxu0 0
      %535 = vmatpush2.bf16.msra.mxu0 0
      %536 = vmatprep.mubr.bf16.mxu0 0
      %537 = vmatmul.mubr.bf16.gmra.mxu0 %v502
      %v538 = vpop.f32.mrf.mxu0
      %v539 = vadd.f32 %v490, %v538
      %v540 = vpop.f32.mrf.mxu0
      %v541 = vpop.f32.mrf.mxu0
      %v542 = vadd.f32 %v493, %v541
      %v543 = vpop.f32.mrf.mxu0
      %544 = vdwg.mxu0
      %v545 = vld [vmem:[%s3] sm:$0xff]
      %v546 = vld [vmem:[%s3 + $0x8] sm:$0xff]
      %548 = vset.pattern.permute.xlu0 0
      %549 = vperm.xlu0 %548, %v545
      %v550 = vpop.permute.xlu0 %549
      %553 = vset.pattern.permute.xlu0 0
      %554 = vperm.xlu0 %553, %v546
      %v555 = vpop.permute.xlu0 %554
      %v557 = vadd.f32 %v437, %v550
      %v558 = vadd.f32 %v440, %v555
      %v559 = vmul.f32 %v557, 0.5
      %v560 = vmul.f32 %v558, 0.5
      %v561 = vmul.f32 %v557, 0.044715
      %v562 = vmul.f32 %v558, 0.044715
      %v563 = vmul.f32 %v561, %v557
      %v564 = vmul.f32 %v562, %v558
      %v565 = vmul.f32 %v563, %v557
      %v566 = vmul.f32 %v564, %v558
      %v567 = vadd.f32 %v557, %v565
      %v568 = vadd.f32 %v558, %v566
      %v569 = vmul.f32 %v567, 0.7978846
      %v570 = vmul.f32 %v568, 0.7978846
      %v571 = vtanh.pop %v569
      %v572 = vtanh.pop %v570
      %v573 = vadd.f32 %v571, 1.0
      %v574 = vadd.f32 %v572, 1.0
      %v575 = vmul.f32 %v559, %v573
      %v576 = vmul.f32 %v560, %v574
      %v577 = vpack.c.bf16 %v576, %v575
      %v579 = vunpack.c.l.b16 %v577
      %v580 = vunpack.c.h.b16 %v577
      %v581 = vpack.c.b16 %v579, %v579
      %v582 = vpack.c.b16 %v580, %v580
      %585 = vst [vmem:[%s293] sm:$0xf] %v581
      %586 = vst [vmem:[%s293 + $0x4] sm:$0xf] %v582
      %v587 = vadd.f32 %v539, %v550
      %v588 = vadd.f32 %v542, %v555
      %v589 = vmul.f32 %v587, 0.5
      %v590 = vmul.f32 %v588, 0.5
      %v591 = vmul.f32 %v587, 0.044715
      %v592 = vmul.f32 %v588, 0.044715
      %v593 = vmul.f32 %v591, %v587
      %v594 = vmul.f32 %v592, %v588
      %v595 = vmul.f32 %v593, %v587
      %v596 = vmul.f32 %v594, %v588
      %v597 = vadd.f32 %v587, %v595
      %v598 = vadd.f32 %v588, %v596
      %v599 = vmul.f32 %v597, 0.7978846
      %v600 = vmul.f32 %v598, 0.7978846
      %v601 = vtanh.pop %v599
      %v602 = vtanh.pop %v600
      %v603 = vadd.f32 %v601, 1.0
      %v604 = vadd.f32 %v602, 1.0
      %v605 = vmul.f32 %v589, %v603
      %v606 = vmul.f32 %v590, %v604
      %v607 = vpack.c.bf16 %v606, %v605
      %v609 = vunpack.c.l.b16 %v607
      %v610 = vunpack.c.h.b16 %v607
      %v611 = vpack.c.b16 %v609, %v609
      %v612 = vpack.c.b16 %v610, %v610
      %615 = vst [vmem:[%s301] sm:$0xf] %v611
      %616 = vst [vmem:[%s301 + $0x4] sm:$0xf] %v612
      %p617 = scmp.lt.s32.totalorder %s21, 1
      %s618 = scalar_select %p617, %s21, 1
      %p619 = scmp.lt.s32.totalorder %s22, 0
      %s620 = scalar_select %p619, %s22, 0
      %s621 = smul.addr %s618, 2
      %s622 = sadd.s32 %s620, %s621
      %s623 = smul.addr %s622, 4
      %s624 = scalar_lea.vmem %s4, %s623
      %p625 = scmp.lt.s32.totalorder %s21, 1
      %s626 = scalar_select %p625, %s21, 1
      %p627 = scmp.lt.s32.totalorder %s22, 0
      %s628 = scalar_select %p627, %s22, 0
      %s629 = smul.addr %s626, 2
      %s630 = sadd.s32 %s628, %s629
      %s631 = smul.addr %s630, 4
      %s632 = scalar_lea.vmem %s5, %s631
      // Predicated region
      $region37: #{upsample_forward.1} parent=35 // pred_check
        %p633 = pneg %p147
      $region38: #{upsample_forward.1} parent=35 // pred_check_branch
        %635 = sbr.rel (%p633) target = $region40
      $region39: #{upsample_forward.1} parent=35 // pred_region
        _
      $region40: #{upsample_forward.1} parent=35 // pred_fallthru
        _
      // Predicated region
      $region41: #{upsample_forward.1} parent=35 // pred_check
        %p636 = pneg %p175
      $region42: #{upsample_forward.1} parent=35 // pred_check_branch
        %638 = sbr.rel (%p636) target = $region44
      $region43: #{upsample_forward.1} parent=35 // pred_region
        _
      $region44: #{upsample_forward.1} parent=35 // pred_fallthru
        _
    $region36: #{upsample_forward.1} parent=5 // pred_fallthru
      _
    %p639 = scmp.le.s32.totalorder 2, %s12
    // Predicated region
    $region45: #{upsample_forward.1} parent=5 // pred_check
      %p640 = pneg %p639
    $region46: #{upsample_forward.1} parent=5 // pred_check_branch
      %642 = sbr.rel (%p640) target = $region48
    $region47: #{upsample_forward.1} parent=5 // pred_region
      %s643 = ssub.s32 %s12, 2
      // Predicated region
      $region49: #{upsample_forward.1} parent=47 // pred_check
        %p644 = pneg %p153
      $region50: #{upsample_forward.1} parent=47 // pred_check_branch
        %646 = sbr.rel (%p644) target = $region52
      $region51: #{upsample_forward.1} parent=47 // pred_region
        %p647 = scmp.lt.s32.totalorder %s23, 1
        %s648 = scalar_select %p647, %s23, 1
        %p649 = scmp.lt.s32.totalorder %s24, 0
        %s650 = scalar_select %p649, %s24, 0
        %s651 = smul.addr %s648, 2
        %s652 = sadd.s32 %s650, %s651
        %s653 = smul.addr %s652, 4
        %s654 = scalar_lea.vmem %s4, %s653
      $region52: #{upsample_forward.1} parent=47 // pred_fallthru
        _
      // Predicated region
      $region53: #{upsample_forward.1} parent=47 // pred_check
        %p655 = pneg %p181
      $region54: #{upsample_forward.1} parent=47 // pred_check_branch
        %657 = sbr.rel (%p655) target = $region56
      $region55: #{upsample_forward.1} parent=47 // pred_region
        %p658 = scmp.lt.s32.totalorder %s23, 1
        %s659 = scalar_select %p658, %s23, 1
        %p660 = scmp.lt.s32.totalorder %s24, 0
        %s661 = scalar_select %p660, %s24, 0
        %s662 = smul.addr %s659, 2
        %s663 = sadd.s32 %s661, %s662
        %s664 = smul.addr %s663, 4
        %s665 = scalar_lea.vmem %s5, %s664
      $region56: #{upsample_forward.1} parent=47 // pred_fallthru
        _
    $region48: #{upsample_forward.1} parent=5 // pred_fallthru
      _
  $region6: #{upsample_forward.1} parent=0 // loop_footer
    %s16 = sadd.s32 1, %s12
  $region7: #{upsample_forward.1} parent=0 // loop_footer_branch
    %11 = sbr.rel target = $region3
  $region8: #{upsample_forward.1} parent=0 // loop_exit
    _

</llo_original>
